<compile_context>
chip_gen: v6e
topology: v6e:2x2x1
jax: 0.10.0
libtpu: 0.0.40
codegen_flags: <defaults>
</compile_context>

<pallas_src>
import functools

import jax
import jax.numpy as jnp
from jax.experimental import pallas as pl
from jax.experimental.pallas import tpu as pltpu

_LANES = 128
_SUBLANES = 8
_CHUNK_ROWS = 256          # in-kernel accumulation chunk: 256*128*4 B = 128 KiB/stream
_DEFAULT_TILE_ROWS = 2048  # 1 MiB f32 per input block; fits every generation's scoped VMEM


def _round_up(a, b):
    return ((a + b - 1) // b) * b


def _sigmoid(x):
    # Single EUP push: sigma(x) = 0.5 * tanh(x/2) + 0.5 (same form XLA uses
    # for `logistic` on TPU, so it matches jax.nn.sigmoid to ~ULP level).
    return 0.5 * jnp.tanh(0.5 * x) + 0.5


def _dice_kernel(x_ref, t_ref, o_ref, *, n_valid, tile_rows, chunk_rows, mask_needed):
    """Per-block partial sums for the dice loss.

    Rows 0-7 of the (16, 128) output block hold numerator partials
    (sum of sigmoid(x) * t); rows 8-15 hold denominator partials
    (sum of sigmoid(x) + t). Everything stays in a vreg-shaped (8, 128)
    layout: the hot loop is DMA + EUP (tanh) + VPU only -- no XLU cross-lane
    reduce and no scalar read-modify-write per tile.
    """
    blk = pl.program_id(0)
    n_chunks = tile_rows // chunk_rows

    def chunk_terms(c):
        r0 = pl.multiple_of(c * chunk_rows, chunk_rows)
        xf = x_ref[pl.ds(r0, chunk_rows), :].astype(jnp.float32)
        tf = t_ref[pl.ds(r0, chunk_rows), :].astype(jnp.float32)
        s = _sigmoid(xf)
        return r0, s * tf, s + tf

    def fold(acc, term):
        # (chunk, 128) -> (8, 128): pure VPU vreg adds (no layout change).
        return acc + jnp.sum(
            term.reshape(chunk_rows // _SUBLANES, _SUBLANES, _LANES), axis=0)

    def body_plain(c, carry):
        num_acc, den_acc = carry
        _, num, den = chunk_terms(c)
        return fold(num_acc, num), fold(den_acc, den)

    zeros = jnp.zeros((_SUBLANES, _LANES), jnp.float32)
    init = (zeros, zeros)

    if not mask_needed:
        # Grid * tile exactly covers the valid data: single unrolled hot loop.
        num_acc, den_acc = jax.lax.fori_loop(0, n_chunks, body_plain, init,
                                             unroll=True)
    else:
        # Ragged case. Chunks fully inside [0, n_valid) take the mask-free hot
        # loop; the (at most one) chunk straddling n_valid takes a masked body
        # (out-of-bounds block rows contain undefined data -- possibly NaN --
        # so contributions are masked with jnp.where, which cannot propagate
        # NaNs); chunks entirely past n_valid are skipped.
        def body_masked(c, carry):
            num_acc, den_acc = carry
            r0, num, den = chunk_terms(c)
            # Flat element index (int32: valid for n_valid < 2**31 elements).
            base = (blk * tile_rows + r0) * _LANES
            flat = (base
                    + jax.lax.broadcasted_iota(jnp.int32, (chunk_rows, _LANES), 0) * _LANES
                    + jax.lax.broadcasted_iota(jnp.int32, (chunk_rows, _LANES), 1))
            valid = flat < n_valid
            num = jnp.where(valid, num, 0.0)
            den = jnp.where(valid, den, 0.0)
            return fold(num_acc, num), fold(den_acc, den)

        epc = chunk_rows * _LANES                 # elements per chunk
        full_total = n_valid // epc               # fully-valid chunks overall
        live_total = -(-n_valid // epc)           # chunks touching valid data
        full = jnp.clip(full_total - blk * n_chunks, 0, n_chunks)
        live = jnp.clip(live_total - blk * n_chunks, 0, n_chunks)
        acc = jax.lax.fori_loop(0, full, body_plain, init)
        num_acc, den_acc = jax.lax.fori_loop(full, live, body_masked, acc)

    o_ref[0:_SUBLANES, :] = num_acc
    o_ref[_SUBLANES:2 * _SUBLANES, :] = den_acc


def dice_loss(inputs, targets, *, smooth=1.0, tile_rows=_DEFAULT_TILE_ROWS):
    """Pallas implementation of DiceLoss.forward (smooth defaults to 1)."""
    x = inputs.reshape(-1)
    t = targets.reshape(-1)
    if not jnp.issubdtype(x.dtype, jnp.floating):
        x = x.astype(jnp.float32)
    if not jnp.issubdtype(t.dtype, jnp.floating):
        t = t.astype(jnp.float32)
    n = x.shape[0]

    # Lane geometry: pad only to complete the last 128-lane row when n is
    # misaligned (one small copy); the common n % 128 == 0 case is a zero-copy
    # reshape. Pad content is irrelevant -- it is masked out in-kernel.
    pad = (-n) % _LANES
    if pad:
        x = jnp.pad(x, (0, pad))
        t = jnp.pad(t, (0, pad))
    rows = (n + pad) // _LANES

    # Tile geometry: multiple of the in-kernel chunk, capped at tile_rows,
    # shrunk for small inputs (single block => no pipeline churn).
    tr = min(_round_up(tile_rows, _SUBLANES), _round_up(rows, _SUBLANES))
    chunk = min(_CHUNK_ROWS, tr)
    tr = _round_up(tr, chunk)
    num_blocks = -(-rows // tr)
    mask_needed = n < num_blocks * tr * _LANES

    x2 = x.reshape(rows, _LANES)
    t2 = t.reshape(rows, _LANES)

    kernel = functools.partial(
        _dice_kernel, n_valid=n, tile_rows=tr, chunk_rows=chunk,
        mask_needed=mask_needed)

    in_blk = pl.BlockSpec((tr, _LANES), lambda i: (i, 0))
    out_blk = pl.BlockSpec((2 * _SUBLANES, _LANES), lambda i: (i, 0))
    out_bytes = num_blocks * 2 * _SUBLANES * _LANES * 4

    parts = pl.pallas_call(
        kernel,
        out_shape=jax.ShapeDtypeStruct((num_blocks * 2 * _SUBLANES, _LANES),
                                       jnp.float32),
        grid_spec=pltpu.PrefetchScalarGridSpec(
            num_scalar_prefetch=0,
            grid=(num_blocks,),
            in_specs=[in_blk, in_blk],
            out_specs=out_blk,
        ),
        compiler_params=pltpu.CompilerParams(
            dimension_semantics=("parallel",),  # megacore-shardable on v7x
        ),
        cost_estimate=pl.CostEstimate(
            flops=6 * rows * _LANES,
            transcendentals=rows * _LANES,
            bytes_accessed=(x2.size * x2.dtype.itemsize
                            + t2.size * t2.dtype.itemsize
                            + out_bytes),
        ),
    )(x2, t2)

    # Tiny final reduction + dice formula (negligible vs. the streaming pass).
    parts = parts.reshape(num_blocks, 2, _SUBLANES, _LANES)
    intersection = jnp.sum(parts[:, 0])
    denominator = jnp.sum(parts[:, 1])
    dice = (2.0 * intersection + smooth) / (denominator + smooth + 1e-9)
    return 1.0 - dice


def dice_loss_ref(inputs, targets, smooth=1.0):
    s = jax.nn.sigmoid(inputs.reshape(-1).astype(jnp.float32))
    t = targets.reshape(-1).astype(jnp.float32)
    inter = jnp.sum(s * t)
    dice = (2.0 * inter + smooth) / (jnp.sum(s) + jnp.sum(t) + smooth + 1e-9)
    return 1.0 - dice


if __name__ == "__main__":
    key = jax.random.PRNGKey(0)
    k1, k2 = jax.random.split(key)
    # NCHW-shaped logits and binary targets, as the PyTorch module expects.
    x = jax.random.normal(k1, (2, 4, 16, 16), dtype=jnp.float32)
    tgt = (jax.random.uniform(k2, (2, 4, 16, 16)) > 0.5).astype(jnp.float32)

    loss = jax.block_until_ready(dice_loss(x, tgt))
    ref = jax.block_until_ready(dice_loss_ref(x, tgt))

    assert jnp.allclose(loss, ref, atol=1e-5, rtol=1e-5), (loss, ref)
    print("KERNEL_OK")
</pallas_src>

<mosaic_0001>
module attributes {stable_mosaic.version = 11 : i64} {
  func.func @_dice_kernel(%arg0: i32, %arg1: memref<16x128xf32, #tpu.memory_space<vmem>>, %arg2: memref<16x128xf32, #tpu.memory_space<vmem>>, %arg3: memref<16x128xf32, #tpu.memory_space<vmem>>) attributes {dimension_semantics = [#tpu.dimension_semantics<parallel>], iteration_bounds = array<i64: 1>, scalar_prefetch = 0 : i64, scratch_operands = 0 : i64, tpu.core_type = #tpu.core_type<tc>, window_params = [{transform_indices = @transform_0, window_bounds = array<i64: 16, 128>}, {transform_indices = @transform_1, window_bounds = array<i64: 16, 128>}, {transform_indices = @transform_2, window_bounds = array<i64: 16, 128>}]} {
    %cst = arith.constant 0.000000e+00 : f32
    %0 = vector.broadcast %cst : f32 to vector<8x128xf32>
    %c0_i32 = arith.constant 0 : i32
    %c16_i32 = arith.constant 16 : i32
    %1 = arith.muli %c0_i32, %c16_i32 : i32
    %2 = tpu.assume_multiple %1, 16 : i32
    %3 = arith.index_cast %2 : i32 to index
    %c0 = arith.constant 0 : index
    %4 = vector.load %arg1[%3, %c0] : memref<16x128xf32, #tpu.memory_space<vmem>>, vector<16x128xf32>
    %5 = arith.index_cast %2 : i32 to index
    %c0_0 = arith.constant 0 : index
    %6 = vector.load %arg2[%5, %c0_0] : memref<16x128xf32, #tpu.memory_space<vmem>>, vector<16x128xf32>
    %cst_1 = arith.constant 5.000000e-01 : f32
    %7 = vector.broadcast %cst_1 : f32 to vector<16x128xf32>
    %8 = arith.mulf %7, %4 : vector<16x128xf32>
    %9 = math.tanh %8 : vector<16x128xf32>
    %cst_2 = arith.constant 5.000000e-01 : f32
    %10 = vector.broadcast %cst_2 : f32 to vector<16x128xf32>
    %11 = arith.mulf %10, %9 : vector<16x128xf32>
    %cst_3 = arith.constant 5.000000e-01 : f32
    %12 = vector.broadcast %cst_3 : f32 to vector<16x128xf32>
    %13 = arith.addf %11, %12 : vector<16x128xf32>
    %14 = arith.mulf %13, %6 : vector<16x128xf32>
    %15 = arith.addf %13, %6 : vector<16x128xf32>
    %16 = vector.shape_cast %14 : vector<16x128xf32> to vector<2x8x128xf32>
    %cst_4 = arith.constant dense<0.000000e+00> : vector<8x128xf32>
    %17 = vector.multi_reduction <add>, %16, %cst_4 [0] : vector<2x8x128xf32> to vector<8x128xf32>
    %18 = arith.addf %0, %17 : vector<8x128xf32>
    %19 = vector.shape_cast %15 : vector<16x128xf32> to vector<2x8x128xf32>
    %cst_5 = arith.constant dense<0.000000e+00> : vector<8x128xf32>
    %20 = vector.multi_reduction <add>, %19, %cst_5 [0] : vector<2x8x128xf32> to vector<8x128xf32>
    %21 = arith.addf %0, %20 : vector<8x128xf32>
    %c1_i32 = arith.constant 1 : i32
    %c0_6 = arith.constant 0 : index
    %c0_7 = arith.constant 0 : index
    %22 = vector.load %arg3[%c0_6, %c0_7] : memref<16x128xf32, #tpu.memory_space<vmem>>, vector<8x128xf32>
    tpu.vector_store %arg3[%c0_6, %c0_7], %18 {strides = array<i32>} : memref<16x128xf32, #tpu.memory_space<vmem>>, vector<8x128xf32>,
    %c8 = arith.constant 8 : index
    %c0_8 = arith.constant 0 : index
    %23 = vector.load %arg3[%c8, %c0_8] : memref<16x128xf32, #tpu.memory_space<vmem>>, vector<8x128xf32>
    tpu.vector_store %arg3[%c8, %c0_8], %21 {strides = array<i32>} : memref<16x128xf32, #tpu.memory_space<vmem>>, vector<8x128xf32>,
    return
  }
  func.func @transform_0(%arg0: i32) -> (i32, i32) {
    %c0_i32 = arith.constant 0 : i32
    %c0_i32_0 = arith.constant 0 : i32
    return %arg0, %c0_i32 : i32, i32
  }
  func.func @transform_1(%arg0: i32) -> (i32, i32) {
    %c0_i32 = arith.constant 0 : i32
    %c0_i32_0 = arith.constant 0 : i32
    return %arg0, %c0_i32 : i32, i32
  }
  func.func @transform_2(%arg0: i32) -> (i32, i32) {
    %c0_i32 = arith.constant 0 : i32
    %c0_i32_0 = arith.constant 0 : i32
    return %arg0, %c0_i32 : i32, i32
  }
}

</mosaic_0001>

<llo_original>
// kernel: tpu_custom_call.1
$region0: #{tpu_custom_call.1}
  #allocation0 [shape = 'u32[]', space=smem, size = 0x4, offset = 0x4, fixed_abs, tag = 'smem constant byte address 0x4 - core index']
  #allocation1 [shape = 'u32[144,128]{1,0:T(1,128)}', space=vmem, size = 0x12000, scoped, tag = 'internal scratch']
  %s0 = inlined_call_operand.hbm [shape: f32[16,128], index: 0, kind: input, shape index: {}]
  %s1 = inlined_call_operand.hbm [shape: f32[16,128], index: 1, kind: input, shape index: {}]
  %s2 = inlined_call_operand.hbm [shape: f32[16,128], index: 2, kind: output, shape index: {}]
  %s3 = sld [smem:[#allocation0]]
  $region26: #{tpu_custom_call.1} parent=0
    _
  %s5 = ssub.s32 1, %s3
  %s6 = scalar_select 0, %s5, %s3
  $region1: #{tpu_custom_call.1} parent=0
    #allocation2 [shape = 'u8[8192]{0}', space=vmem, size = 0x2000, scoped, tag = 'input window, operand 0, single buffered']
    #allocation3 [shape = 's32[1]{0}', space=sflag, size = 0x4, scoped, tag = 'scoped memory for tpu_custom_call.1']
    #allocation4 [shape = 's32[1]{0}', space=sflag, size = 0x4, scoped, tag = 'scoped memory for tpu_custom_call.1']
    #allocation5 [shape = 'u8[8192]{0}', space=vmem, size = 0x2000, scoped, tag = 'input window, operand 1, single buffered']
    #allocation6 [shape = 's32[1]{0}', space=sflag, size = 0x4, scoped, tag = 'scoped memory for tpu_custom_call.1']
    #allocation7 [shape = 'u8[8192]{0}', space=vmem, size = 0x2000, scoped, tag = 'output window, operand 0, single buffered']
    %7 = vsyncpa [#allocation3], 0
    %8 = vsyncpa [#allocation6], 0
    %9 = vsyncpa [#allocation4], 0
    // Predicated region
    $region2: #{tpu_custom_call.1} parent=1 // pred_check
      _
    $region3: #{tpu_custom_call.1} parent=1 // pred_check_branch
      %11 = sbr.rel (0) target = $region5
    $region4: #{tpu_custom_call.1} parent=1 // pred_region
      %s13 = ssub.s32 256, 256
      %14 = vsyncadd [#allocation3], %s13
      %s15 = sshll.u32 [#allocation2], 4
      %s16 = int_to_ptr.vmem [resolvable:$true] %s15
      %21 = dma.hbm_to_vmem [thread:$0]  %s0, 256, %s16, [#allocation3], 128, 128, 8
    $region5: #{tpu_custom_call.1} parent=1 // pred_fallthru
      _
    // Predicated region
    $region6: #{tpu_custom_call.1} parent=1 // pred_check
      _
    $region7: #{tpu_custom_call.1} parent=1 // pred_check_branch
      %23 = sbr.rel (0) target = $region9
    $region8: #{tpu_custom_call.1} parent=1 // pred_region
      %s25 = ssub.s32 256, 256
      %26 = vsyncadd [#allocation6], %s25
      %s27 = sshll.u32 [#allocation5], 4
      %s28 = int_to_ptr.vmem [resolvable:$true] %s27
      %33 = dma.hbm_to_vmem [thread:$0]  %s1, 256, %s28, [#allocation6], 128, 128, 8
    $region9: #{tpu_custom_call.1} parent=1 // pred_fallthru
      _
    // Predicated region
    $region10: #{tpu_custom_call.1} parent=1 // pred_check
      _
    $region11: #{tpu_custom_call.1} parent=1 // pred_check_branch
      %35 = sbr.rel (0) target = $region13
    $region12: #{tpu_custom_call.1} parent=1 // pred_region
      %36 = dma.done [#allocation3], 256
    $region13: #{tpu_custom_call.1} parent=1 // pred_fallthru
      _
    // Predicated region
    $region14: #{tpu_custom_call.1} parent=1 // pred_check
      _
    $region15: #{tpu_custom_call.1} parent=1 // pred_check_branch
      %38 = sbr.rel (0) target = $region17
    $region16: #{tpu_custom_call.1} parent=1 // pred_region
      %39 = dma.done [#allocation6], 256
    $region17: #{tpu_custom_call.1} parent=1 // pred_fallthru
      _
    %v40 = vld [vmem:[#allocation2] sm:$0xff]
    %v41 = vld [vmem:[#allocation2 + $0x8] sm:$0xff]
    %v42 = vld [vmem:[#allocation5] sm:$0xff]
    %v43 = vld [vmem:[#allocation5 + $0x8] sm:$0xff]
    %v44 = vmul.f32 %v40, 0.5
    %v45 = vmul.f32 %v41, 0.5
    %v46 = vtanh.pop %v44
    %v47 = vtanh.pop %v45
    %v48 = vmul.f32 %v46, 0.5
    %v49 = vmul.f32 %v47, 0.5
    %v50 = vadd.f32 %v48, 0.5
    %v51 = vadd.f32 %v49, 0.5
    %v52 = vmul.f32 %v50, %v42
    %v53 = vmul.f32 %v51, %v43
    %v54 = vadd.f32 %v50, %v42
    %v55 = vadd.f32 %v51, %v43
    %v56 = vadd.f32 %v52, %v53
    %v57 = vadd.f32 %v56, 0.0
    %v58 = vadd.f32 %v54, %v55
    %v59 = vadd.f32 %v58, 0.0
    %60 = vst [vmem:[#allocation7] sm:$0xff] %v57
    %61 = vst [vmem:[#allocation7 + $0x8] sm:$0xff] %v59
    // Predicated region
    $region18: #{tpu_custom_call.1} parent=1 // pred_check
      _
    $region19: #{tpu_custom_call.1} parent=1 // pred_check_branch
      %63 = sbr.rel (0) target = $region21
    $region20: #{tpu_custom_call.1} parent=1 // pred_region
      %s65 = ssub.s32 256, 256
      %66 = vsyncadd [#allocation4], %s65
      %s67 = sshll.u32 [#allocation7], 4
      %s68 = int_to_ptr.vmem [resolvable:$true] %s67
      %73 = dma.vmem_to_hbm [thread:$0]  %s68, 256, %s2, [#allocation4], 128, 128, 8
    $region21: #{tpu_custom_call.1} parent=1 // pred_fallthru
      _
    // Predicated region
    $region22: #{tpu_custom_call.1} parent=1 // pred_check
      _
    $region23: #{tpu_custom_call.1} parent=1 // pred_check_branch
      %75 = sbr.rel (0) target = $region25
    $region24: #{tpu_custom_call.1} parent=1 // pred_region
      %76 = dma.done [#allocation4], 256
    $region25: #{tpu_custom_call.1} parent=1 // pred_fallthru
      _
    %77 = vsyncpa [#allocation3], 1
    %78 = vsyncpa [#allocation6], 1
    %79 = vsyncpa [#allocation4], 1

</llo_original>
